<compile_context>
chip_gen: v7x
topology: tpu7x:2x2x1
jax: 0.10.0
libtpu: 0.0.40
codegen_flags: <defaults>
</compile_context>

<pallas_src>
import jax
import jax.numpy as jnp
from jax.experimental import pallas as pl
from jax.experimental.pallas import tpu as pltpu

_BN_EPS = 1e-5
_LANE = 128


def _round_up(n, m):
    return ((n + m - 1) // m) * m


def _pad_to(a, shape):
    pads = [(0, t - s) for s, t in zip(a.shape, shape)]
    if all(p == (0, 0) for p in pads):
        return a
    return jnp.pad(a, pads)  # zero padding (exact for matmul; gamma=0 => BN pad cols stay 0)


def _pick_h_tile(hp, preferred=512):
    t = min(hp, preferred)
    while hp % t:
        t -= _LANE
    return max(t, _LANE)


def _projection_head_kernel(x_ref, w1_ref, g1_ref, b1_ref,
                            w2_ref, g2_ref, b2_ref, o_ref, acc_ref):
    k = pl.program_id(0)

    @pl.when(k == 0)
    def _init():
        acc_ref[...] = jnp.zeros_like(acc_ref)

    # ---- Linear 1 slice: [B, Din] @ [Din, TH] -> [B, TH] (MXU, bf16 in / f32 acc)
    h = jnp.dot(x_ref[...], w1_ref[...], preferred_element_type=jnp.float32)

    # ---- BatchNorm1d over the fully-resident batch, folded into scale/shift
    mean1 = jnp.mean(h, axis=0, keepdims=True)
    var1 = jnp.mean((h - mean1) * (h - mean1), axis=0, keepdims=True)
    s1 = g1_ref[...] * jax.lax.rsqrt(var1 + _BN_EPS)
    t1 = b1_ref[...] - mean1 * s1

    # ---- ReLU, then partial Linear 2 accumulated over the H grid axis (MXU)
    r = jnp.maximum(h * s1 + t1, 0.0).astype(jnp.bfloat16)
    acc_ref[...] += jnp.dot(r, w2_ref[...], preferred_element_type=jnp.float32)

    # ---- Final step: BatchNorm over the completed z, lane-dense store
    @pl.when(k == pl.num_programs(0) - 1)
    def _finalize():
        z = acc_ref[...]
        mean2 = jnp.mean(z, axis=0, keepdims=True)
        var2 = jnp.mean((z - mean2) * (z - mean2), axis=0, keepdims=True)
        s2 = g2_ref[...] * jax.lax.rsqrt(var2 + _BN_EPS)
        t2 = b2_ref[...] - mean2 * s2
        o_ref[...] = (z * s2 + t2).astype(o_ref.dtype)


def projection_head_nonlinear(x, w1, g1, b1, w2, g2, b2):
    """SimCLR 'nonlinear' ProjectionHead forward (training-mode BN).

    x : [B, Din] f32; w1 : [Din, H], w2 : [H, Dout] (pre-transposed weights,
    no bias); g1/b1 : [1, H]; g2/b2 : [1, Dout].  Returns [B, Dout] f32.
    """
    B, Din = x.shape
    H = w1.shape[1]
    Dout = w2.shape[1]

    # Lane-dense (x128) padding of every feature dimension.
    Dinp, Hp, Doutp = (_round_up(d, _LANE) for d in (Din, H, Dout))

    x_p = _pad_to(x, (B, Dinp)).astype(jnp.bfloat16)
    w1_p = _pad_to(w1, (Dinp, Hp)).astype(jnp.bfloat16)
    w2_p = _pad_to(w2, (Hp, Doutp)).astype(jnp.bfloat16)
    g1_p = _pad_to(g1, (1, Hp)).astype(jnp.float32)
    b1_p = _pad_to(b1, (1, Hp)).astype(jnp.float32)
    g2_p = _pad_to(g2, (1, Doutp)).astype(jnp.float32)
    b2_p = _pad_to(b2, (1, Doutp)).astype(jnp.float32)

    th = _pick_h_tile(Hp)
    grid = (Hp // th,)

    # VMEM budget: resident x / out / acc + double-buffered streamed tiles.
    vmem_bytes = (
        B * Dinp * 2                                  # x (bf16, resident)
        + 2 * (Dinp * th * 2 + th * Doutp * 2)        # W1/W2 tiles, double-buffered
        + 2 * (2 * th * 4 + 2 * Doutp * 4)            # gamma/beta tiles
        + 3 * B * Doutp * 4                           # acc scratch + output
    )
    vmem_limit = int(min(max(2 * vmem_bytes, 4 * 1024 * 1024), 64 * 1024 * 1024))

    flops = 2 * B * (Dinp * Hp + Hp * Doutp)
    bytes_accessed = sum(int(a.size) * a.dtype.itemsize for a in
                         (x_p, w1_p, g1_p, b1_p, w2_p, g2_p, b2_p)) + B * Doutp * 4

    out_p = pl.pallas_call(
        _projection_head_kernel,
        out_shape=jax.ShapeDtypeStruct((B, Doutp), jnp.float32),
        grid_spec=pltpu.PrefetchScalarGridSpec(
            num_scalar_prefetch=0,
            grid=grid,
            in_specs=[
                pl.BlockSpec((B, Dinp), lambda k: (0, 0)),     # x      (resident)
                pl.BlockSpec((Dinp, th), lambda k: (0, k)),    # W1     (streamed over H)
                pl.BlockSpec((1, th), lambda k: (0, k)),       # gamma1
                pl.BlockSpec((1, th), lambda k: (0, k)),       # beta1
                pl.BlockSpec((th, Doutp), lambda k: (k, 0)),   # W2     (streamed over H)
                pl.BlockSpec((1, Doutp), lambda k: (0, 0)),    # gamma2 (resident)
                pl.BlockSpec((1, Doutp), lambda k: (0, 0)),    # beta2  (resident)
            ],
            out_specs=pl.BlockSpec((B, Doutp), lambda k: (0, 0)),
            scratch_shapes=[pltpu.VMEM((B, Doutp), jnp.float32)],
        ),
        compiler_params=pltpu.CompilerParams(
            dimension_semantics=("arbitrary",),  # H is a reduction axis for matmul 2
            vmem_limit_bytes=vmem_limit,
        ),
        cost_estimate=pl.CostEstimate(
            flops=flops, transcendentals=Hp + Doutp, bytes_accessed=bytes_accessed),
    )(x_p, w1_p, g1_p, b1_p, w2_p, g2_p, b2_p)

    return out_p[:, :Dout]


def _reference_f32(x, w1, g1, b1, w2, g2, b2):
    """Pure-f32 PyTorch-semantics reference (training-mode BN)."""
    h = x @ w1
    m1 = h.mean(0, keepdims=True)
    v1 = ((h - m1) ** 2).mean(0, keepdims=True)
    h = (h - m1) / jnp.sqrt(v1 + _BN_EPS) * g1 + b1
    h = jnp.maximum(h, 0.0)
    z = h @ w2
    m2 = z.mean(0, keepdims=True)
    v2 = ((z - m2) ** 2).mean(0, keepdims=True)
    return (z - m2) / jnp.sqrt(v2 + _BN_EPS) * g2 + b2


def _reference_mixed(x, w1, g1, b1, w2, g2, b2):
    """Reference mirroring the kernel's dtype policy (bf16 MXU, f32 BN)."""
    h = jnp.dot(x.astype(jnp.bfloat16), w1.astype(jnp.bfloat16),
                preferred_element_type=jnp.float32)
    m1 = h.mean(0, keepdims=True)
    v1 = ((h - m1) ** 2).mean(0, keepdims=True)
    s1 = g1 * jax.lax.rsqrt(v1 + _BN_EPS)
    r = jnp.maximum(h * s1 + (b1 - m1 * s1), 0.0).astype(jnp.bfloat16)
    z = jnp.dot(r, w2.astype(jnp.bfloat16), preferred_element_type=jnp.float32)
    m2 = z.mean(0, keepdims=True)
    v2 = ((z - m2) ** 2).mean(0, keepdims=True)
    s2 = g2 * jax.lax.rsqrt(v2 + _BN_EPS)
    return z * s2 + (b2 - m2 * s2)


if __name__ == "__main__":
    # Small shapes consistent with ProjectionHead(in=32, hidden=32, out=16, 'nonlinear').
    B, Din, H, Dout = 8, 32, 32, 16

    key = jax.random.PRNGKey(0)
    kx, kw1, kw2, kg1, kb1, kg2, kb2 = jax.random.split(key, 7)

    x = jax.random.normal(kx, (B, Din), dtype=jnp.float32)
    w1 = jax.random.uniform(kw1, (Din, H), jnp.float32,
                            -1.0 / jnp.sqrt(Din), 1.0 / jnp.sqrt(Din))
    w2 = jax.random.uniform(kw2, (H, Dout), jnp.float32,
                            -1.0 / jnp.sqrt(H), 1.0 / jnp.sqrt(H))
    g1 = 1.0 + 0.1 * jax.random.normal(kg1, (1, H), jnp.float32)
    b1 = 0.1 * jax.random.normal(kb1, (1, H), jnp.float32)
    g2 = 1.0 + 0.1 * jax.random.normal(kg2, (1, Dout), jnp.float32)
    b2 = 0.1 * jax.random.normal(kb2, (1, Dout), jnp.float32)

    out = projection_head_nonlinear(x, w1, g1, b1, w2, g2, b2)
    out = jax.block_until_ready(out)
    assert out.shape == (B, Dout)
    assert bool(jnp.all(jnp.isfinite(out)))

    # Tight check against a reference using the kernel's exact dtype policy.
    ref_mixed = _reference_mixed(x, w1, g1, b1, w2, g2, b2)
    assert jnp.allclose(out, ref_mixed, atol=1e-4, rtol=1e-4), \
        float(jnp.max(jnp.abs(out - ref_mixed)))

    # Loose check against pure-f32 PyTorch semantics (bf16 MXU rounding only).
    ref_f32 = _reference_f32(x, w1, g1, b1, w2, g2, b2)
    assert jnp.allclose(out, ref_f32, atol=5e-2, rtol=5e-2), \
        float(jnp.max(jnp.abs(out - ref_f32)))

    print("KERNEL_OK")
</pallas_src>

<mosaic_0001>
module attributes {stable_mosaic.version = 11 : i64} {
  func.func @_projection_head_kernel(%arg0: i32, %arg1: memref<8x128xbf16, #tpu.memory_space<vmem>>, %arg2: memref<128x128xbf16, #tpu.memory_space<vmem>>, %arg3: memref<1x128xf32, #tpu.memory_space<vmem>>, %arg4: memref<1x128xf32, #tpu.memory_space<vmem>>, %arg5: memref<128x128xbf16, #tpu.memory_space<vmem>>, %arg6: memref<1x128xf32, #tpu.memory_space<vmem>>, %arg7: memref<1x128xf32, #tpu.memory_space<vmem>>, %arg8: memref<8x128xf32, #tpu.memory_space<vmem>>, %arg9: memref<8x128xf32, #tpu.memory_space<vmem>>) attributes {dimension_semantics = [#tpu.dimension_semantics<arbitrary>], iteration_bounds = array<i64: 1>, scalar_prefetch = 0 : i64, scratch_operands = 1 : i64, tpu.core_type = #tpu.core_type<tc>, window_params = [{pipeline_mode = #tpu.pipeline_mode<synchronous>, transform_indices = @transform_0, window_bounds = array<i64: 8, 128>}, {transform_indices = @transform_1, window_bounds = array<i64: 128, 128>}, {transform_indices = @transform_2, window_bounds = array<i64: 1, 128>}, {transform_indices = @transform_3, window_bounds = array<i64: 1, 128>}, {transform_indices = @transform_4, window_bounds = array<i64: 128, 128>}, {pipeline_mode = #tpu.pipeline_mode<synchronous>, transform_indices = @transform_5, window_bounds = array<i64: 1, 128>}, {pipeline_mode = #tpu.pipeline_mode<synchronous>, transform_indices = @transform_6, window_bounds = array<i64: 1, 128>}, {pipeline_mode = #tpu.pipeline_mode<synchronous>, transform_indices = @transform_7, window_bounds = array<i64: 8, 128>}]} {
    %c0_i32 = arith.constant 0 : i32
    %0 = arith.cmpi eq, %arg0, %c0_i32 : i32
    %1 = arith.extui %0 : i1 to i32
    %c0_i32_0 = arith.constant 0 : i32
    %2 = arith.cmpi ne, %1, %c0_i32_0 : i32
    scf.if %2 {
      %cst_23 = arith.constant 0.000000e+00 : f32
      %42 = vector.broadcast %cst_23 : f32 to vector<8x128xf32>
      %c0_24 = arith.constant 0 : index
      %c0_25 = arith.constant 0 : index
      %43 = vector.load %arg9[%c0_24, %c0_25] : memref<8x128xf32, #tpu.memory_space<vmem>>, vector<8x128xf32>
      tpu.vector_store %arg9[%c0_24, %c0_25], %42 {strides = array<i32>} : memref<8x128xf32, #tpu.memory_space<vmem>>, vector<8x128xf32>,
    } else {
    }
    %c0 = arith.constant 0 : index
    %c0_1 = arith.constant 0 : index
    %3 = vector.load %arg1[%c0, %c0_1] : memref<8x128xbf16, #tpu.memory_space<vmem>>, vector<8x128xbf16>
    %c0_2 = arith.constant 0 : index
    %c0_3 = arith.constant 0 : index
    %4 = vector.load %arg2[%c0_2, %c0_3] : memref<128x128xbf16, #tpu.memory_space<vmem>>, vector<128x128xbf16>
    %cst = arith.constant dense<0.000000e+00> : vector<8x128xf32>
    %5 = tpu.matmul %3, %4, %cst {dimension_numbers = #tpu.dot_dimension_numbers<[1], [0], [0], [1], [0, 0, 1, 1], [], []>} : vector<8x128xbf16>, vector<128x128xbf16>, vector<8x128xf32> -> vector<8x128xf32>
    %cst_4 = arith.constant dense<0.000000e+00> : vector<128xf32>
    %6 = vector.multi_reduction <add>, %5, %cst_4 [0] : vector<8x128xf32> to vector<128xf32>
    %7 = vector.shape_cast %6 : vector<128xf32> to vector<1x128xf32>
    %cst_5 = arith.constant 8.000000e+00 : f32
    %8 = vector.broadcast %cst_5 : f32 to vector<1x128xf32>
    %9 = arith.divf %7, %8 : vector<1x128xf32>
    %10 = vector.broadcast %9 : vector<1x128xf32> to vector<8x128xf32>
    %11 = arith.subf %5, %10 : vector<8x128xf32>
    %12 = vector.broadcast %9 : vector<1x128xf32> to vector<8x128xf32>
    %13 = arith.subf %5, %12 : vector<8x128xf32>
    %14 = arith.mulf %11, %13 : vector<8x128xf32>
    %cst_6 = arith.constant dense<0.000000e+00> : vector<128xf32>
    %15 = vector.multi_reduction <add>, %14, %cst_6 [0] : vector<8x128xf32> to vector<128xf32>
    %16 = vector.shape_cast %15 : vector<128xf32> to vector<1x128xf32>
    %cst_7 = arith.constant 8.000000e+00 : f32
    %17 = vector.broadcast %cst_7 : f32 to vector<1x128xf32>
    %18 = arith.divf %16, %17 : vector<1x128xf32>
    %c0_8 = arith.constant 0 : index
    %c0_9 = arith.constant 0 : index
    %19 = vector.load %arg3[%c0_8, %c0_9] : memref<1x128xf32, #tpu.memory_space<vmem>>, vector<1x128xf32>
    %cst_10 = arith.constant 9.99999974E-6 : f32
    %20 = vector.broadcast %cst_10 : f32 to vector<1x128xf32>
    %21 = arith.addf %18, %20 : vector<1x128xf32>
    %22 = math.rsqrt %21 : vector<1x128xf32>
    %23 = arith.mulf %19, %22 : vector<1x128xf32>
    %c0_11 = arith.constant 0 : index
    %c0_12 = arith.constant 0 : index
    %24 = vector.load %arg4[%c0_11, %c0_12] : memref<1x128xf32, #tpu.memory_space<vmem>>, vector<1x128xf32>
    %25 = arith.mulf %9, %23 : vector<1x128xf32>
    %26 = arith.subf %24, %25 : vector<1x128xf32>
    %27 = vector.broadcast %23 : vector<1x128xf32> to vector<8x128xf32>
    %28 = arith.mulf %5, %27 : vector<8x128xf32>
    %29 = vector.broadcast %26 : vector<1x128xf32> to vector<8x128xf32>
    %30 = arith.addf %28, %29 : vector<8x128xf32>
    %cst_13 = arith.constant 0.000000e+00 : f32
    %31 = vector.broadcast %cst_13 : f32 to vector<8x128xf32>
    %32 = arith.maximumf %30, %31 : vector<8x128xf32>
    %33 = arith.truncf %32 : vector<8x128xf32> to vector<8x128xbf16>
    %c0_14 = arith.constant 0 : index
    %c0_15 = arith.constant 0 : index
    %34 = vector.load %arg9[%c0_14, %c0_15] : memref<8x128xf32, #tpu.memory_space<vmem>>, vector<8x128xf32>
    %c0_16 = arith.constant 0 : index
    %c0_17 = arith.constant 0 : index
    %35 = vector.load %arg5[%c0_16, %c0_17] : memref<128x128xbf16, #tpu.memory_space<vmem>>, vector<128x128xbf16>
    %cst_18 = arith.constant dense<0.000000e+00> : vector<8x128xf32>
    %36 = tpu.matmul %33, %35, %cst_18 {dimension_numbers = #tpu.dot_dimension_numbers<[1], [0], [0], [1], [0, 0, 1, 1], [], []>} : vector<8x128xbf16>, vector<128x128xbf16>, vector<8x128xf32> -> vector<8x128xf32>
    %37 = arith.addf %34, %36 : vector<8x128xf32>
    %c0_19 = arith.constant 0 : index
    %c0_20 = arith.constant 0 : index
    %38 = vector.load %arg9[%c0_19, %c0_20] : memref<8x128xf32, #tpu.memory_space<vmem>>, vector<8x128xf32>
    tpu.vector_store %arg9[%c0_19, %c0_20], %37 {strides = array<i32>} : memref<8x128xf32, #tpu.memory_space<vmem>>, vector<8x128xf32>,
    %c0_i32_21 = arith.constant 0 : i32
    %39 = arith.cmpi eq, %arg0, %c0_i32_21 : i32
    %40 = arith.extui %39 : i1 to i32
    %c0_i32_22 = arith.constant 0 : i32
    %41 = arith.cmpi ne, %40, %c0_i32_22 : i32
    scf.if %41 {
      %c0_23 = arith.constant 0 : index
      %c0_24 = arith.constant 0 : index
      %42 = vector.load %arg9[%c0_23, %c0_24] : memref<8x128xf32, #tpu.memory_space<vmem>>, vector<8x128xf32>
      %cst_25 = arith.constant dense<0.000000e+00> : vector<128xf32>
      %43 = vector.multi_reduction <add>, %42, %cst_25 [0] : vector<8x128xf32> to vector<128xf32>
      %44 = vector.shape_cast %43 : vector<128xf32> to vector<1x128xf32>
      %cst_26 = arith.constant 8.000000e+00 : f32
      %45 = vector.broadcast %cst_26 : f32 to vector<1x128xf32>
      %46 = arith.divf %44, %45 : vector<1x128xf32>
      %47 = vector.broadcast %46 : vector<1x128xf32> to vector<8x128xf32>
      %48 = arith.subf %42, %47 : vector<8x128xf32>
      %49 = vector.broadcast %46 : vector<1x128xf32> to vector<8x128xf32>
      %50 = arith.subf %42, %49 : vector<8x128xf32>
      %51 = arith.mulf %48, %50 : vector<8x128xf32>
      %cst_27 = arith.constant dense<0.000000e+00> : vector<128xf32>
      %52 = vector.multi_reduction <add>, %51, %cst_27 [0] : vector<8x128xf32> to vector<128xf32>
      %53 = vector.shape_cast %52 : vector<128xf32> to vector<1x128xf32>
      %cst_28 = arith.constant 8.000000e+00 : f32
      %54 = vector.broadcast %cst_28 : f32 to vector<1x128xf32>
      %55 = arith.divf %53, %54 : vector<1x128xf32>
      %c0_29 = arith.constant 0 : index
      %c0_30 = arith.constant 0 : index
      %56 = vector.load %arg6[%c0_29, %c0_30] : memref<1x128xf32, #tpu.memory_space<vmem>>, vector<1x128xf32>
      %cst_31 = arith.constant 9.99999974E-6 : f32
      %57 = vector.broadcast %cst_31 : f32 to vector<1x128xf32>
      %58 = arith.addf %55, %57 : vector<1x128xf32>
      %59 = math.rsqrt %58 : vector<1x128xf32>
      %60 = arith.mulf %56, %59 : vector<1x128xf32>
      %c0_32 = arith.constant 0 : index
      %c0_33 = arith.constant 0 : index
      %61 = vector.load %arg7[%c0_32, %c0_33] : memref<1x128xf32, #tpu.memory_space<vmem>>, vector<1x128xf32>
      %62 = arith.mulf %46, %60 : vector<1x128xf32>
      %63 = arith.subf %61, %62 : vector<1x128xf32>
      %64 = vector.broadcast %60 : vector<1x128xf32> to vector<8x128xf32>
      %65 = arith.mulf %42, %64 : vector<8x128xf32>
      %66 = vector.broadcast %63 : vector<1x128xf32> to vector<8x128xf32>
      %67 = arith.addf %65, %66 : vector<8x128xf32>
      %c0_34 = arith.constant 0 : index
      %c0_35 = arith.constant 0 : index
      %68 = vector.load %arg8[%c0_34, %c0_35] : memref<8x128xf32, #tpu.memory_space<vmem>>, vector<8x128xf32>
      tpu.vector_store %arg8[%c0_34, %c0_35], %67 {strides = array<i32>} : memref<8x128xf32, #tpu.memory_space<vmem>>, vector<8x128xf32>,
    } else {
    }
    return
  }
  func.func @transform_0(%arg0: i32) -> (i32, i32) {
    %c0_i32 = arith.constant 0 : i32
    %c0_i32_0 = arith.constant 0 : i32
    %c0_i32_1 = arith.constant 0 : i32
    return %c0_i32, %c0_i32_0 : i32, i32
  }
  func.func @transform_1(%arg0: i32) -> (i32, i32) {
    %c0_i32 = arith.constant 0 : i32
    %c0_i32_0 = arith.constant 0 : i32
    return %c0_i32, %arg0 : i32, i32
  }
  func.func @transform_2(%arg0: i32) -> (i32, i32) {
    %c0_i32 = arith.constant 0 : i32
    %c0_i32_0 = arith.constant 0 : i32
    return %c0_i32, %arg0 : i32, i32
  }
  func.func @transform_3(%arg0: i32) -> (i32, i32) {
    %c0_i32 = arith.constant 0 : i32
    %c0_i32_0 = arith.constant 0 : i32
    return %c0_i32, %arg0 : i32, i32
  }
  func.func @transform_4(%arg0: i32) -> (i32, i32) {
    %c0_i32 = arith.constant 0 : i32
    %c0_i32_0 = arith.constant 0 : i32
    return %arg0, %c0_i32 : i32, i32
  }
  func.func @transform_5(%arg0: i32) -> (i32, i32) {
    %c0_i32 = arith.constant 0 : i32
    %c0_i32_0 = arith.constant 0 : i32
    %c0_i32_1 = arith.constant 0 : i32
    return %c0_i32, %c0_i32_0 : i32, i32
  }
  func.func @transform_6(%arg0: i32) -> (i32, i32) {
    %c0_i32 = arith.constant 0 : i32
    %c0_i32_0 = arith.constant 0 : i32
    %c0_i32_1 = arith.constant 0 : i32
    return %c0_i32, %c0_i32_0 : i32, i32
  }
  func.func @transform_7(%arg0: i32) -> (i32, i32) {
    %c0_i32 = arith.constant 0 : i32
    %c0_i32_0 = arith.constant 0 : i32
    %c0_i32_1 = arith.constant 0 : i32
    return %c0_i32, %c0_i32_0 : i32, i32
  }
}

</mosaic_0001>

<llo_original>
// kernel: tpu_custom_call.1
$region0: #{tpu_custom_call.1}
  #allocation0 [shape = 'u32[]', space=smem, size = 0x4, offset = 0x4, fixed_abs, tag = 'smem constant byte address 0x4 - core index']
  #allocation1 [shape = 'u32[144,128]{1,0:T(1,128)}', space=vmem, size = 0x12000, scoped, tag = 'internal scratch']
  #allocation2 [shape = 'f32[8,128]{1,0:T(8,128)}', space=vmem, size = 0x1000, scoped, tag = 'scratch operand']
  %s0 = inlined_call_operand.hbm [shape: bf16[8,128], index: 0, kind: input, shape index: {}]
  %s1 = inlined_call_operand.hbm [shape: bf16[128,128], index: 1, kind: input, shape index: {}]
  %s2 = inlined_call_operand.vmem [shape: f32[1,128], index: 2, kind: input, shape index: {}]
  %s3 = inlined_call_operand.vmem [shape: f32[1,128], index: 3, kind: input, shape index: {}]
  %s4 = inlined_call_operand.hbm [shape: bf16[128,128], index: 4, kind: input, shape index: {}]
  %s5 = inlined_call_operand.vmem [shape: f32[1,128], index: 5, kind: input, shape index: {}]
  %s6 = inlined_call_operand.vmem [shape: f32[1,128], index: 6, kind: input, shape index: {}]
  %s7 = inlined_call_operand.hbm [shape: f32[8,128], index: 7, kind: output, shape index: {}]
  %s8 = sld [smem:[#allocation0]]
  $region58: #{tpu_custom_call.1} parent=0
    _
  %s10 = ssub.s32 1, %s8
  %s11 = scalar_select 0, %s10, %s8
  $region1: #{tpu_custom_call.1} parent=0
    #allocation3 [shape = 'u8[2048]{0}', space=vmem, size = 0x800, scoped, tag = 'input window, operand 0, single buffered']
    #allocation4 [shape = 's32[1]{0}', space=sflag, size = 0x4, scoped, tag = 'scoped memory for tpu_custom_call.1']
    #allocation5 [shape = 's32[1]{0}', space=sflag, size = 0x4, scoped, tag = 'scoped memory for tpu_custom_call.1']
    #allocation6 [shape = 'u8[32768]{0}', space=vmem, size = 0x8000, scoped, tag = 'input window, operand 1, single buffered']
    #allocation7 [shape = 's32[1]{0}', space=sflag, size = 0x4, scoped, tag = 'scoped memory for tpu_custom_call.1']
    #allocation8 [shape = 'u8[32768]{0}', space=vmem, size = 0x8000, scoped, tag = 'input window, operand 4, single buffered']
    #allocation9 [shape = 'u8[4096]{0}', space=vmem, size = 0x1000, scoped, tag = 'output window, operand 0, single buffered']
    %12 = vsyncpa [#allocation4], 0
    %13 = vsyncpa [#allocation7], 0
    %14 = vsyncpa [#allocation5], 0
    // Predicated region
    $region2: #{tpu_custom_call.1} parent=1 // pred_check
      _
    $region3: #{tpu_custom_call.1} parent=1 // pred_check_branch
      %16 = sbr.rel (0) target = $region5
    $region4: #{tpu_custom_call.1} parent=1 // pred_region
      %s18 = ssub.s32 64, 64
      %19 = vsyncadd [#allocation4], %s18
      %s21 = sshll.u32 [#allocation3], 4
      %s22 = int_to_ptr.vmem [resolvable:$true] %s21
      %24 = dma.hbm_to_vmem [thread:$0]  %s0, 64, %s22, [#allocation4]
    $region5: #{tpu_custom_call.1} parent=1 // pred_fallthru
      _
    // Predicated region
    $region6: #{tpu_custom_call.1} parent=1 // pred_check
      _
    $region7: #{tpu_custom_call.1} parent=1 // pred_check_branch
      %26 = sbr.rel (0) target = $region9
    $region8: #{tpu_custom_call.1} parent=1 // pred_region
      %s28 = ssub.s32 1024, 1024
      %29 = vsyncadd [#allocation7], %s28
      %s30 = sshll.u32 [#allocation6], 4
      %s31 = int_to_ptr.vmem [resolvable:$true] %s30
      %36 = dma.hbm_to_vmem [thread:$0]  %s1, 1024, %s31, [#allocation7], 64, 64, 4
    $region9: #{tpu_custom_call.1} parent=1 // pred_fallthru
      _
    // Predicated region
    $region10: #{tpu_custom_call.1} parent=1 // pred_check
      _
    $region11: #{tpu_custom_call.1} parent=1 // pred_check_branch
      %38 = sbr.rel (0) target = $region13
    $region12: #{tpu_custom_call.1} parent=1 // pred_region
      _
    $region13: #{tpu_custom_call.1} parent=1 // pred_fallthru
      _
    // Predicated region
    $region14: #{tpu_custom_call.1} parent=1 // pred_check
      _
    $region15: #{tpu_custom_call.1} parent=1 // pred_check_branch
      %40 = sbr.rel (0) target = $region17
    $region16: #{tpu_custom_call.1} parent=1 // pred_region
      _
    $region17: #{tpu_custom_call.1} parent=1 // pred_fallthru
      _
    // Predicated region
    $region18: #{tpu_custom_call.1} parent=1 // pred_check
      _
    $region19: #{tpu_custom_call.1} parent=1 // pred_check_branch
      %42 = sbr.rel (0) target = $region21
    $region20: #{tpu_custom_call.1} parent=1 // pred_region
      %s44 = ssub.s32 1024, 1024
      %45 = vsyncadd [#allocation7], %s44
      %s46 = sshll.u32 [#allocation8], 4
      %s47 = int_to_ptr.vmem [resolvable:$true] %s46
      %52 = dma.hbm_to_vmem [thread:$0]  %s4, 1024, %s47, [#allocation7], 64, 64, 4
    $region21: #{tpu_custom_call.1} parent=1 // pred_fallthru
      _
    // Predicated region
    $region22: #{tpu_custom_call.1} parent=1 // pred_check
      _
    $region23: #{tpu_custom_call.1} parent=1 // pred_check_branch
      %54 = sbr.rel (0) target = $region25
    $region24: #{tpu_custom_call.1} parent=1 // pred_region
      _
    $region25: #{tpu_custom_call.1} parent=1 // pred_fallthru
      _
    // Predicated region
    $region26: #{tpu_custom_call.1} parent=1 // pred_check
      _
    $region27: #{tpu_custom_call.1} parent=1 // pred_check_branch
      %56 = sbr.rel (0) target = $region29
    $region28: #{tpu_custom_call.1} parent=1 // pred_region
      _
    $region29: #{tpu_custom_call.1} parent=1 // pred_fallthru
      _
    // Predicated region
    $region30: #{tpu_custom_call.1} parent=1 // pred_check
      _
    $region31: #{tpu_custom_call.1} parent=1 // pred_check_branch
      %58 = sbr.rel (0) target = $region33
    $region32: #{tpu_custom_call.1} parent=1 // pred_region
      %59 = dma.done [#allocation4], 64
    $region33: #{tpu_custom_call.1} parent=1 // pred_fallthru
      _
    // Predicated region
    $region34: #{tpu_custom_call.1} parent=1 // pred_check
      _
    $region35: #{tpu_custom_call.1} parent=1 // pred_check_branch
      %61 = sbr.rel (0) target = $region37
    $region36: #{tpu_custom_call.1} parent=1 // pred_region
      %62 = dma.done [#allocation7], 1024
    $region37: #{tpu_custom_call.1} parent=1 // pred_fallthru
      _
    // Predicated region
    $region38: #{tpu_custom_call.1} parent=1 // pred_check
      _
    $region39: #{tpu_custom_call.1} parent=1 // pred_check_branch
      %64 = sbr.rel (0) target = $region41
    $region40: #{tpu_custom_call.1} parent=1 // pred_region
      %65 = dma.done [#allocation7], 1024
    $region41: #{tpu_custom_call.1} parent=1 // pred_fallthru
      _
    %p67 = scmp.eq.s32.totalorder 0, 0
    // Predicated region
    $region42: #{tpu_custom_call.1} parent=1 // pred_check
      %p68 = pneg %p67
    $region43: #{tpu_custom_call.1} parent=1 // pred_check_branch
      %70 = sbr.rel (%p68) target = $region45
    $region44: #{tpu_custom_call.1} parent=1 // pred_region
      %71 = vst [vmem:[#allocation2] sm:$0xff] 0.0
    $region45: #{tpu_custom_call.1} parent=1 // pred_fallthru
      _
    %v72 = vld [vmem:[#allocation3] sm:$0xf]
    %v73 = vld [vmem:[#allocation6] sm:$0xf]
    %v74 = vld [vmem:[#allocation6 + $0x4] sm:$0xf]
    %v75 = vld [vmem:[#allocation6 + $0x8] sm:$0xf]
    %v76 = vld [vmem:[#allocation6 + $0xc] sm:$0xf]
    %v77 = vld [vmem:[#allocation6 + $0x10] sm:$0xf]
    %v78 = vld [vmem:[#allocation6 + $0x14] sm:$0xf]
    %v79 = vld [vmem:[#allocation6 + $0x18] sm:$0xf]
    %v80 = vld [vmem:[#allocation6 + $0x1c] sm:$0xf]
    %v81 = vld [vmem:[#allocation6 + $0x20] sm:$0xf]
    %v82 = vld [vmem:[#allocation6 + $0x24] sm:$0xf]
    %v83 = vld [vmem:[#allocation6 + $0x28] sm:$0xf]
    %v84 = vld [vmem:[#allocation6 + $0x2c] sm:$0xf]
    %v85 = vld [vmem:[#allocation6 + $0x30] sm:$0xf]
    %v86 = vld [vmem:[#allocation6 + $0x34] sm:$0xf]
    %v87 = vld [vmem:[#allocation6 + $0x38] sm:$0xf]
    %v88 = vld [vmem:[#allocation6 + $0x3c] sm:$0xf]
    %v105 = vunpack.c.l.b16 %v73
    %v106 = vunpack.c.l.b16 %v74
    %v107 = vunpack.c.l.b16 %v75
    %v108 = vunpack.c.l.b16 %v76
    %v109 = vunpack.c.l.b16 %v77
    %v110 = vunpack.c.l.b16 %v78
    %v111 = vunpack.c.l.b16 %v79
    %v112 = vunpack.c.l.b16 %v80
    %v113 = vunpack.c.l.b16 %v81
    %v114 = vunpack.c.l.b16 %v82
    %v115 = vunpack.c.l.b16 %v83
    %v116 = vunpack.c.l.b16 %v84
    %v117 = vunpack.c.l.b16 %v85
    %v118 = vunpack.c.l.b16 %v86
    %v119 = vunpack.c.l.b16 %v87
    %v120 = vunpack.c.l.b16 %v88
    %v121 = vpack.c.b16 %v106, %v105
    %v122 = vpack.c.b16 %v108, %v107
    %v123 = vpack.c.b16 %v110, %v109
    %v124 = vpack.c.b16 %v112, %v111
    %v125 = vpack.c.b16 %v114, %v113
    %v126 = vpack.c.b16 %v116, %v115
    %v127 = vpack.c.b16 %v118, %v117
    %v128 = vpack.c.b16 %v120, %v119
    %137 = vmatprep.subr.bf16.mxu0 0
    %138 = vmatpush1.bf16.msra.mxu0 %v121
    %139 = vmatprep.subr.bf16.mxu0 0
    %140 = vmatpush1.bf16.msra.mxu0 %v122
    %141 = vmatprep.subr.bf16.mxu0 0
    %142 = vmatpush1.bf16.msra.mxu0 %v123
    %143 = vmatprep.subr.bf16.mxu0 0
    %144 = vmatpush1.bf16.msra.mxu0 %v124
    %145 = vmatprep.subr.bf16.mxu0 0
    %146 = vmatpush1.bf16.msra.mxu0 %v125
    %147 = vmatprep.subr.bf16.mxu0 0
    %148 = vmatpush1.bf16.msra.mxu0 %v126
    %149 = vmatprep.subr.bf16.mxu0 0
    %150 = vmatpush1.bf16.msra.mxu0 %v127
    %151 = vmatprep.subr.bf16.mxu0 0
    %152 = vmatpush1.bf16.msra.mxu0 %v128
    %153 = vmatprep.subr.bf16.mxu0 0
    %154 = vmatpush1.bf16.msra.mxu0 0
    %155 = vmatprep.subr.bf16.mxu0 0
    %156 = vmatpush1.bf16.msra.mxu0 0
    %157 = vmatprep.subr.bf16.mxu0 0
    %158 = vmatpush1.bf16.msra.mxu0 0
    %159 = vmatprep.subr.bf16.mxu0 0
    %160 = vmatpush1.bf16.msra.mxu0 0
    %161 = vmatprep.subr.bf16.mxu0 0
    %162 = vmatpush1.bf16.msra.mxu0 0
    %163 = vmatprep.subr.bf16.mxu0 0
    %164 = vmatpush1.bf16.msra.mxu0 0
    %165 = vmatprep.subr.bf16.mxu0 0
    %166 = vmatpush1.bf16.msra.mxu0 0
    %167 = vmatprep.subr.bf16.mxu0 0
    %168 = vmatpush1.bf16.msra.mxu0 0
    %169 = vmatprep.mubr.bf16.mxu0 0
    %170 = vmatmul.mubr.bf16.gmra.mrb[0].mxu0 %v72
    %v171 = vpop.f32.mrb[0].mxu0
    %v172 = vadd.f32 0.0, %v171
    %v173 = vpop.f32.mrb[0].mxu0
    %v174 = vpop.f32.mrb[0].mxu0
    %v175 = vpop.f32.mrb[0].mxu0
    %176 = vdwg.mxu0
    %v177 = vrot.slane %v172, 4
    %v178 = vadd.f32 %v172, %v177
    %v179 = vrot.slane %v178, 2
    %v180 = vadd.f32 %v178, %v179
    %v181 = vrot.slane %v180, 1
    %v182 = vadd.f32 %v180, %v181
    %v183 = vrcp.pop 8.0
    %v184 = vmul.f32 %v182, %v183
    %v185 = vsub.f32 %v172, %v184
    %v186 = vmul.f32 %v185, %v185
    %v187 = vrot.slane %v186, 4
    %v188 = vadd.f32 %v186, %v187
    %v189 = vrot.slane %v188, 2
    %v190 = vadd.f32 %v188, %v189
    %v191 = vrot.slane %v190, 1
    %v192 = vadd.f32 %v190, %v191
    %v193 = vmul.f32 %v192, %v183
    %v194 = vld [vmem:[%s2] sm:$0x1]
    %v195 = vadd.f32 %v193, 1e-05
    %v196 = vrsqrt.pop %v195
    %v197 = vmul.f32 %v194, %v196
    %v198 = vld [vmem:[%s3] sm:$0x1]
    %v199 = vmul.f32 %v184, %v197
    %v200 = vsub.f32 %v198, %v199
    %v202 = vlaneseq
    %v203 = vshrl.u32 %v202, 7
    %v204 = vsub.s32 0, %v203
    %v205 = vrot.slane %v197, %v204
    %v207 = vmul.f32 %v172, %v205
    %v209 = vlaneseq
    %v210 = vshrl.u32 %v209, 7
    %v211 = vsub.s32 0, %v210
    %v212 = vrot.slane %v200, %v211
    %v214 = vadd.f32 %v207, %v212
    %v215 = vmax.f32 %v214, 0.0
    %v216 = vpack.c.bf16 %v215, %v215
    %v217 = vld [vmem:[#allocation2] sm:$0xff]
    %v218 = vld [vmem:[#allocation8] sm:$0xf]
    %v219 = vld [vmem:[#allocation8 + $0x4] sm:$0xf]
    %v220 = vld [vmem:[#allocation8 + $0x8] sm:$0xf]
    %v221 = vld [vmem:[#allocation8 + $0xc] sm:$0xf]
    %v222 = vld [vmem:[#allocation8 + $0x10] sm:$0xf]
    %v223 = vld [vmem:[#allocation8 + $0x14] sm:$0xf]
    %v224 = vld [vmem:[#allocation8 + $0x18] sm:$0xf]
    %v225 = vld [vmem:[#allocation8 + $0x1c] sm:$0xf]
    %v226 = vld [vmem:[#allocation8 + $0x20] sm:$0xf]
    %v227 = vld [vmem:[#allocation8 + $0x24] sm:$0xf]
    %v228 = vld [vmem:[#allocation8 + $0x28] sm:$0xf]
    %v229 = vld [vmem:[#allocation8 + $0x2c] sm:$0xf]
    %v230 = vld [vmem:[#allocation8 + $0x30] sm:$0xf]
    %v231 = vld [vmem:[#allocation8 + $0x34] sm:$0xf]
    %v232 = vld [vmem:[#allocation8 + $0x38] sm:$0xf]
    %v233 = vld [vmem:[#allocation8 + $0x3c] sm:$0xf]
    %v250 = vunpack.c.l.b16 %v218
    %v251 = vunpack.c.l.b16 %v219
    %v252 = vunpack.c.l.b16 %v220
    %v253 = vunpack.c.l.b16 %v221
    %v254 = vunpack.c.l.b16 %v222
    %v255 = vunpack.c.l.b16 %v223
    %v256 = vunpack.c.l.b16 %v224
    %v257 = vunpack.c.l.b16 %v225
    %v258 = vunpack.c.l.b16 %v226
    %v259 = vunpack.c.l.b16 %v227
    %v260 = vunpack.c.l.b16 %v228
    %v261 = vunpack.c.l.b16 %v229
    %v262 = vunpack.c.l.b16 %v230
    %v263 = vunpack.c.l.b16 %v231
    %v264 = vunpack.c.l.b16 %v232
    %v265 = vunpack.c.l.b16 %v233
    %v266 = vpack.c.b16 %v251, %v250
    %v267 = vpack.c.b16 %v253, %v252
    %v268 = vpack.c.b16 %v255, %v254
    %v269 = vpack.c.b16 %v257, %v256
    %v270 = vpack.c.b16 %v259, %v258
    %v271 = vpack.c.b16 %v261, %v260
    %v272 = vpack.c.b16 %v263, %v262
    %v273 = vpack.c.b16 %v265, %v264
    %282 = vmatprep.subr.bf16.mxu0 0
    %283 = vmatpush1.bf16.msra.mxu0 %v266
    %284 = vmatprep.subr.bf16.mxu0 0
    %285 = vmatpush1.bf16.msra.mxu0 %v267
    %286 = vmatprep.subr.bf16.mxu0 0
    %287 = vmatpush1.bf16.msra.mxu0 %v268
    %288 = vmatprep.subr.bf16.mxu0 0
    %289 = vmatpush1.bf16.msra.mxu0 %v269
    %290 = vmatprep.subr.bf16.mxu0 0
    %291 = vmatpush1.bf16.msra.mxu0 %v270
    %292 = vmatprep.subr.bf16.mxu0 0
    %293 = vmatpush1.bf16.msra.mxu0 %v271
    %294 = vmatprep.subr.bf16.mxu0 0
    %295 = vmatpush1.bf16.msra.mxu0 %v272
    %296 = vmatprep.subr.bf16.mxu0 0
    %297 = vmatpush1.bf16.msra.mxu0 %v273
    %298 = vmatprep.subr.bf16.mxu0 0
    %299 = vmatpush1.bf16.msra.mxu0 0
    %300 = vmatprep.subr.bf16.mxu0 0
    %301 = vmatpush1.bf16.msra.mxu0 0
    %302 = vmatprep.subr.bf16.mxu0 0
    %303 = vmatpush1.bf16.msra.mxu0 0
    %304 = vmatprep.subr.bf16.mxu0 0
    %305 = vmatpush1.bf16.msra.mxu0 0
    %306 = vmatprep.subr.bf16.mxu0 0
    %307 = vmatpush1.bf16.msra.mxu0 0
    %308 = vmatprep.subr.bf16.mxu0 0
    %309 = vmatpush1.bf16.msra.mxu0 0
    %310 = vmatprep.subr.bf16.mxu0 0
    %311 = vmatpush1.bf16.msra.mxu0 0
    %312 = vmatprep.subr.bf16.mxu0 0
    %313 = vmatpush1.bf16.msra.mxu0 0
    %314 = vmatprep.mubr.bf16.mxu0 0
    %315 = vmatmul.mubr.bf16.gmra.mrb[0].mxu0 %v216
    %v316 = vpop.f32.mrb[0].mxu0
    %v317 = vadd.f32 0.0, %v316
    %v318 = vpop.f32.mrb[0].mxu0
    %v319 = vpop.f32.mrb[0].mxu0
    %v320 = vpop.f32.mrb[0].mxu0
    %321 = vdwg.mxu0
    %v322 = vadd.f32 %v217, %v317
    %323 = vst [vmem:[#allocation2] sm:$0xff] %v322
    // Predicated region
    $region46: #{tpu_custom_call.1} parent=1 // pred_check
      %p324 = pneg %p67
    $region47: #{tpu_custom_call.1} parent=1 // pred_check_branch
      %326 = sbr.rel (%p324) target = $region49
    $region48: #{tpu_custom_call.1} parent=1 // pred_region
      %v327 = vld [vmem:[#allocation2] sm:$0xff]
      %v328 = vrot.slane %v327, 4
      %v329 = vadd.f32 %v327, %v328
      %v330 = vrot.slane %v329, 2
      %v331 = vadd.f32 %v329, %v330
      %v332 = vrot.slane %v331, 1
      %v333 = vadd.f32 %v331, %v332
      %v334 = vmul.f32 %v333, %v183
      %v335 = vsub.f32 %v327, %v334
      %v336 = vmul.f32 %v335, %v335
      %v337 = vrot.slane %v336, 4
      %v338 = vadd.f32 %v336, %v337
      %v339 = vrot.slane %v338, 2
      %v340 = vadd.f32 %v338, %v339
      %v341 = vrot.slane %v340, 1
      %v342 = vadd.f32 %v340, %v341
      %v343 = vmul.f32 %v342, %v183
      %v344 = vld [vmem:[%s5] sm:$0x1]
      %v345 = vadd.f32 %v343, 1e-05
      %v346 = vrsqrt.pop %v345
      %v347 = vmul.f32 %v344, %v346
      %v348 = vld [vmem:[%s6] sm:$0x1]
      %v349 = vmul.f32 %v334, %v347
      %v350 = vsub.f32 %v348, %v349
      %v352 = vlaneseq
      %v353 = vshrl.u32 %v352, 7
      %v354 = vsub.s32 0, %v353
      %v355 = vrot.slane %v347, %v354
      %v357 = vmul.f32 %v327, %v355
      %v359 = vlaneseq
      %v360 = vshrl.u32 %v359, 7
      %v361 = vsub.s32 0, %v360
      %v362 = vrot.slane %v350, %v361
      %v364 = vadd.f32 %v357, %v362
      %365 = vst [vmem:[#allocation9] sm:$0xff] %v364
    $region49: #{tpu_custom_call.1} parent=1 // pred_fallthru
      _
    // Predicated region
    $region50: #{tpu_custom_call.1} parent=1 // pred_check
      _
    $region51: #{tpu_custom_call.1} parent=1 // pred_check_branch
      %367 = sbr.rel (0) target = $region53
    $region52: #{tpu_custom_call.1} parent=1 // pred_region
      %s369 = ssub.s32 128, 128
      %370 = vsyncadd [#allocation5], %s369
      %s372 = sshll.u32 [#allocation9], 4
      %s373 = int_to_ptr.vmem [resolvable:$true] %s372
      %375 = dma.vmem_to_hbm [thread:$0]  %s373, 128, %s7, [#allocation5]
    $region53: #{tpu_custom_call.1} parent=1 // pred_fallthru
      _
    // Predicated region
    $region54: #{tpu_custom_call.1} parent=1 // pred_check
      _
    $region55: #{tpu_custom_call.1} parent=1 // pred_check_branch
      %377 = sbr.rel (0) target = $region57
    $region56: #{tpu_custom_call.1} parent=1 // pred_region
      %378 = dma.done [#allocation5], 128
    $region57: #{tpu_custom_call.1} parent=1 // pred_fallthru
      _
    %379 = vsyncpa [#allocation4], 1
    %380 = vsyncpa [#allocation7], 1
    %381 = vsyncpa [#allocation5], 1

</llo_original>
